<compile_context>
chip_gen: v6e
topology: v6e:2x2x1
jax: 0.10.0
libtpu: 0.0.40
codegen_flags: <defaults>
</compile_context>

<pallas_src>
import jax
import jax.numpy as jnp
from jax.experimental import pallas as pl
from jax.experimental.pallas import tpu as pltpu


def _sigmoid_mul_kernel(gate_ref, x_ref, o_ref):
    # gate_ref: (TR, 1)   -- per (n, c) scalar gate
    # x_ref:    (TR, THW) -- activations tile
    # o_ref:    (TR, THW)
    gate = gate_ref[...].astype(jnp.float32)          # upcast for EUP sigmoid
    s = jax.nn.sigmoid(gate)                          # (TR, 1), f32
    o_ref[...] = (s * x_ref[...].astype(jnp.float32)).astype(o_ref.dtype)


def _choose_tiles(rows, hw, itemsize):
    """Pick (TR, THW): lane-dense THW (multiple of 128), ~2 MiB per tile."""
    # Lane axis: largest divisor of hw that is a multiple of 128 and <= 2048.
    # If hw is not a multiple of 128, keep the full extent (legal block dim).
    if hw % 128 == 0:
        thw = 128
        d = 2048
        while d >= 128:
            if d <= hw and hw % d == 0:
                thw = d
                break
            d -= 128
    else:
        thw = hw

    # Sublane axis: multiple of 8 (or full extent when rows < 8), sized so a
    # single tile stays around ~2 MiB. With double-buffered in + out that is
    # ~8 MiB of VMEM -> safe on v5e (16 MiB scoped default), v6e and v7x.
    if rows <= 8:
        tr = rows
    else:
        target_elems = (2 * 1024 * 1024) // max(1, thw * itemsize)
        tr = min(rows, max(8, target_elems))
        tr = max(8, (tr // 8) * 8)
    return tr, thw


def sigmoid_mul(x10, x6):
    """x10: (N, C, 1, 1) gate, x6: (N, C, H, W). Returns sigmoid(x10) * x6."""
    N, C, H, W = x6.shape
    assert x10.shape == (N, C, 1, 1), (x10.shape, x6.shape)
    rows, hw = N * C, H * W

    gate2d = x10.reshape(rows, 1)
    x2d = x6.reshape(rows, hw)

    itemsize = jnp.dtype(x6.dtype).itemsize
    tr, thw = _choose_tiles(rows, hw, itemsize)
    grid = (pl.cdiv(rows, tr), pl.cdiv(hw, thw))

    out2d = pl.pallas_call(
        _sigmoid_mul_kernel,
        out_shape=jax.ShapeDtypeStruct((rows, hw), x6.dtype),
        grid=grid,
        in_specs=[
            pl.BlockSpec((tr, 1), lambda i, j: (i, 0)),      # gate: row tile only
            pl.BlockSpec((tr, thw), lambda i, j: (i, j)),    # activations
        ],
        out_specs=pl.BlockSpec((tr, thw), lambda i, j: (i, j)),
        compiler_params=pltpu.CompilerParams(
            dimension_semantics=("parallel", "parallel"),
            vmem_limit_bytes=32 * 1024 * 1024,
        ),
    )(gate2d, x2d)

    return out2d.reshape(N, C, H, W)


if __name__ == "__main__":
    # Small shapes consistent with the module: N=1, C=40 (as in the module),
    # spatial reduced from 112 -> 16 to keep the example small.
    key = jax.random.PRNGKey(0)
    k1, k2 = jax.random.split(key)
    N, C, H, W = 1, 40, 16, 16

    x10 = jax.random.normal(k1, (N, C, 1, 1), dtype=jnp.float32)
    x6 = jax.random.normal(k2, (N, C, H, W), dtype=jnp.float32)

    out = sigmoid_mul(x10, x6)
    out = jax.block_until_ready(out)

    # Reference check in plain JAX.
    ref = jax.nn.sigmoid(x10) * x6
    assert out.shape == (N, C, H, W)
    assert jnp.allclose(out, ref, atol=1e-6, rtol=1e-6)

    print("KERNEL_OK")
</pallas_src>

<mosaic_0001>
module attributes {stable_mosaic.version = 11 : i64} {
  func.func @_sigmoid_mul_kernel(%arg0: i32, %arg1: i32, %arg2: memref<40x1xf32, #tpu.memory_space<vmem>>, %arg3: memref<40x256xf32, #tpu.memory_space<vmem>>, %arg4: memref<40x256xf32, #tpu.memory_space<vmem>>) attributes {dimension_semantics = [#tpu.dimension_semantics<parallel>, #tpu.dimension_semantics<parallel>], iteration_bounds = array<i64: 1, 1>, scalar_prefetch = 0 : i64, scratch_operands = 0 : i64, tpu.core_type = #tpu.core_type<tc>, window_params = [{transform_indices = @transform_0, window_bounds = array<i64: 40, 1>}, {transform_indices = @transform_1, window_bounds = array<i64: 40, 256>}, {transform_indices = @transform_2, window_bounds = array<i64: 40, 256>}]} {
    %c0 = arith.constant 0 : index
    %c0_0 = arith.constant 0 : index
    %0 = vector.load %arg2[%c0, %c0_0] : memref<40x1xf32, #tpu.memory_space<vmem>>, vector<40x1xf32>
    %1 = arith.negf %0 : vector<40x1xf32>
    %2 = math.exp %1 : vector<40x1xf32>
    %cst = arith.constant 1.000000e+00 : f32
    %3 = vector.broadcast %cst : f32 to vector<40x1xf32>
    %4 = arith.addf %3, %2 : vector<40x1xf32>
    %5 = arith.divf %3, %4 : vector<40x1xf32>
    %c0_1 = arith.constant 0 : index
    %c0_2 = arith.constant 0 : index
    %6 = vector.load %arg3[%c0_1, %c0_2] : memref<40x256xf32, #tpu.memory_space<vmem>>, vector<40x256xf32>
    %7 = vector.broadcast %5 : vector<40x1xf32> to vector<40x256xf32>
    %8 = arith.mulf %7, %6 : vector<40x256xf32>
    %c0_3 = arith.constant 0 : index
    %c0_4 = arith.constant 0 : index
    %9 = vector.load %arg4[%c0_3, %c0_4] : memref<40x256xf32, #tpu.memory_space<vmem>>, vector<40x256xf32>
    tpu.vector_store %arg4[%c0_3, %c0_4], %8 {strides = array<i32>} : memref<40x256xf32, #tpu.memory_space<vmem>>, vector<40x256xf32>,
    return
  }
  func.func @transform_0(%arg0: i32, %arg1: i32) -> (i32, i32) {
    %c0_i32 = arith.constant 0 : i32
    %c0_i32_0 = arith.constant 0 : i32
    return %arg0, %c0_i32 : i32, i32
  }
  func.func @transform_1(%arg0: i32, %arg1: i32) -> (i32, i32) {
    %c0_i32 = arith.constant 0 : i32
    return %arg0, %arg1 : i32, i32
  }
  func.func @transform_2(%arg0: i32, %arg1: i32) -> (i32, i32) {
    %c0_i32 = arith.constant 0 : i32
    return %arg0, %arg1 : i32, i32
  }
}

</mosaic_0001>

<llo_original>
// kernel: tpu_custom_call.1
$region0: #{tpu_custom_call.1}
  #allocation0 [shape = 'u32[]', space=smem, size = 0x4, offset = 0x4, fixed_abs, tag = 'smem constant byte address 0x4 - core index']
  #allocation1 [shape = 'u32[144,128]{1,0:T(1,128)}', space=vmem, size = 0x12000, scoped, tag = 'internal scratch']
  %s0 = inlined_call_operand.vmem [shape: f32[40,1], index: 0, kind: input, shape index: {}]
  %s1 = inlined_call_operand.hbm [shape: f32[40,256], index: 1, kind: input, shape index: {}]
  %s2 = inlined_call_operand.hbm [shape: f32[40,256], index: 2, kind: output, shape index: {}]
  %s3 = sld [smem:[#allocation0]]
  $region22: #{tpu_custom_call.1} parent=0
    _
  %s5 = ssub.s32 1, %s3
  %s6 = scalar_select 0, %s5, %s3
  $region1: #{tpu_custom_call.1} parent=0
    #allocation2 [shape = 'u8[40960]{0}', space=vmem, size = 0xa000, scoped, tag = 'input window, operand 1, single buffered']
    #allocation3 [shape = 's32[1]{0}', space=sflag, size = 0x4, scoped, tag = 'scoped memory for tpu_custom_call.1']
    #allocation4 [shape = 's32[1]{0}', space=sflag, size = 0x4, scoped, tag = 'scoped memory for tpu_custom_call.1']
    #allocation5 [shape = 'u8[40960]{0}', space=vmem, size = 0xa000, scoped, tag = 'output window, operand 0, single buffered']
    %7 = vsyncpa [#allocation3], 0
    %8 = vsyncpa [#allocation4], 0
    // Predicated region
    $region2: #{tpu_custom_call.1} parent=1 // pred_check
      _
    $region3: #{tpu_custom_call.1} parent=1 // pred_check_branch
      %10 = sbr.rel (0) target = $region5
    $region4: #{tpu_custom_call.1} parent=1 // pred_region
      _
    $region5: #{tpu_custom_call.1} parent=1 // pred_fallthru
      _
    // Predicated region
    $region6: #{tpu_custom_call.1} parent=1 // pred_check
      _
    $region7: #{tpu_custom_call.1} parent=1 // pred_check_branch
      %12 = sbr.rel (0) target = $region9
    $region8: #{tpu_custom_call.1} parent=1 // pred_region
      %s14 = ssub.s32 1280, 1280
      %15 = vsyncadd [#allocation3], %s14
      %s16 = sshll.u32 [#allocation2], 4
      %s17 = int_to_ptr.vmem [resolvable:$true] %s16
      %22 = dma.hbm_to_vmem [thread:$0]  %s1, 1280, %s17, [#allocation3], 256, 256, 16
    $region9: #{tpu_custom_call.1} parent=1 // pred_fallthru
      _
    // Predicated region
    $region10: #{tpu_custom_call.1} parent=1 // pred_check
      _
    $region11: #{tpu_custom_call.1} parent=1 // pred_check_branch
      %24 = sbr.rel (0) target = $region13
    $region12: #{tpu_custom_call.1} parent=1 // pred_region
      %25 = dma.done [#allocation3], 1280
    $region13: #{tpu_custom_call.1} parent=1 // pred_fallthru
      _
    %v26 = vld [vmem:[%s0] sm:$0xff]
    %v27 = vld [vmem:[%s0 + $0x8] sm:$0xff]
    %v28 = vld [vmem:[%s0 + $0x10] sm:$0xff]
    %v29 = vld [vmem:[%s0 + $0x18] sm:$0xff]
    %v30 = vld [vmem:[%s0 + $0x20] sm:$0xff]
    %v31 = vxor.u32 %v26, 2147483648
    %v32 = vxor.u32 %v27, 2147483648
    %v33 = vxor.u32 %v28, 2147483648
    %v34 = vxor.u32 %v29, 2147483648
    %v35 = vxor.u32 %v30, 2147483648
    %v36 = vmul.f32 %v31, 1.442695
    %v37 = vpow.pop %v36
    %v38 = vmul.f32 %v32, 1.442695
    %v39 = vpow.pop %v38
    %v40 = vmul.f32 %v33, 1.442695
    %v41 = vpow.pop %v40
    %v42 = vmul.f32 %v34, 1.442695
    %v43 = vpow.pop %v42
    %v44 = vmul.f32 %v35, 1.442695
    %v45 = vpow.pop %v44
    %v46 = vadd.f32 %v37, 1.0
    %v47 = vadd.f32 %v39, 1.0
    %v48 = vadd.f32 %v41, 1.0
    %v49 = vadd.f32 %v43, 1.0
    %v50 = vadd.f32 %v45, 1.0
    %v51 = vrcp.pop %v46
    %v52 = vmul.f32 1.0, %v51
    %v53 = vrcp.pop %v47
    %v54 = vmul.f32 1.0, %v53
    %v55 = vrcp.pop %v48
    %v56 = vmul.f32 1.0, %v55
    %v57 = vrcp.pop %v49
    %v58 = vmul.f32 1.0, %v57
    %v59 = vrcp.pop %v50
    %v60 = vmul.f32 1.0, %v59
    %v61 = vld [vmem:[#allocation2] sm:$0xff]
    %v62 = vld [vmem:[#allocation2 + $0x8] sm:$0xff]
    %v63 = vld [vmem:[#allocation2 + $0x10] sm:$0xff]
    %v64 = vld [vmem:[#allocation2 + $0x18] sm:$0xff]
    %v65 = vld [vmem:[#allocation2 + $0x20] sm:$0xff]
    %v66 = vld [vmem:[#allocation2 + $0x28] sm:$0xff]
    %v67 = vld [vmem:[#allocation2 + $0x30] sm:$0xff]
    %v68 = vld [vmem:[#allocation2 + $0x38] sm:$0xff]
    %v69 = vld [vmem:[#allocation2 + $0x40] sm:$0xff]
    %v70 = vld [vmem:[#allocation2 + $0x48] sm:$0xff]
    %72 = vset.pattern.permute.xlu0 0
    %73 = vperm.xlu0 %72, %v52
    %v74 = vpop.permute.xlu0 %73
    %77 = vset.pattern.permute.xlu0 0
    %78 = vperm.xlu0 %77, %v54
    %v79 = vpop.permute.xlu0 %78
    %82 = vset.pattern.permute.xlu0 0
    %83 = vperm.xlu0 %82, %v56
    %v84 = vpop.permute.xlu0 %83
    %87 = vset.pattern.permute.xlu0 0
    %88 = vperm.xlu0 %87, %v58
    %v89 = vpop.permute.xlu0 %88
    %92 = vset.pattern.permute.xlu0 0
    %93 = vperm.xlu0 %92, %v60
    %v94 = vpop.permute.xlu0 %93
    %v96 = vmul.f32 %v74, %v61
    %v97 = vmul.f32 %v74, %v62
    %v98 = vmul.f32 %v79, %v63
    %v99 = vmul.f32 %v79, %v64
    %v100 = vmul.f32 %v84, %v65
    %v101 = vmul.f32 %v84, %v66
    %v102 = vmul.f32 %v89, %v67
    %v103 = vmul.f32 %v89, %v68
    %v104 = vmul.f32 %v94, %v69
    %v105 = vmul.f32 %v94, %v70
    %106 = vst [vmem:[#allocation5] sm:$0xff] %v96
    %107 = vst [vmem:[#allocation5 + $0x8] sm:$0xff] %v97
    %108 = vst [vmem:[#allocation5 + $0x10] sm:$0xff] %v98
    %109 = vst [vmem:[#allocation5 + $0x18] sm:$0xff] %v99
    %110 = vst [vmem:[#allocation5 + $0x20] sm:$0xff] %v100
    %111 = vst [vmem:[#allocation5 + $0x28] sm:$0xff] %v101
    %112 = vst [vmem:[#allocation5 + $0x30] sm:$0xff] %v102
    %113 = vst [vmem:[#allocation5 + $0x38] sm:$0xff] %v103
    %114 = vst [vmem:[#allocation5 + $0x40] sm:$0xff] %v104
    %115 = vst [vmem:[#allocation5 + $0x48] sm:$0xff] %v105
    // Predicated region
    $region14: #{tpu_custom_call.1} parent=1 // pred_check
      _
    $region15: #{tpu_custom_call.1} parent=1 // pred_check_branch
      %117 = sbr.rel (0) target = $region17
    $region16: #{tpu_custom_call.1} parent=1 // pred_region
      %s119 = ssub.s32 1280, 1280
      %120 = vsyncadd [#allocation4], %s119
      %s121 = sshll.u32 [#allocation5], 4
      %s122 = int_to_ptr.vmem [resolvable:$true] %s121
      %127 = dma.vmem_to_hbm [thread:$0]  %s122, 1280, %s2, [#allocation4], 256, 256, 16
    $region17: #{tpu_custom_call.1} parent=1 // pred_fallthru
      _
    // Predicated region
    $region18: #{tpu_custom_call.1} parent=1 // pred_check
      _
    $region19: #{tpu_custom_call.1} parent=1 // pred_check_branch
      %129 = sbr.rel (0) target = $region21
    $region20: #{tpu_custom_call.1} parent=1 // pred_region
      %130 = dma.done [#allocation4], 1280
    $region21: #{tpu_custom_call.1} parent=1 // pred_fallthru
      _
    %131 = vsyncpa [#allocation3], 1
    %132 = vsyncpa [#allocation4], 1

</llo_original>
